<compile_context>
chip_gen: v6e
topology: v6e:2x2x1
jax: 0.10.0
libtpu: 0.0.40
codegen_flags: <defaults>
</compile_context>

<pallas_src>
import functools

import jax
import jax.numpy as jnp
from jax.experimental import pallas as pl
from jax.experimental.pallas import tpu as pltpu

LN_EPS = 1e-5
LANE = 128
SUBLANE = 8


def _cdiv(a, b):
    return -(-a // b)


def _round_up(n, m):
    return _cdiv(n, m) * m


def _vmem_budget_bytes():
    """~75% of this generation's physical VMEM, capped at 100 MiB.
    v5e/v6e (128 MiB) -> 96 MiB, v7x (64 MiB) -> 48 MiB; conservative 48 MiB fallback."""
    try:
        cap = int(pltpu.get_tpu_info().vmem_capacity_bytes)
    except Exception:
        cap = 64 * 1024 * 1024
    return min((cap * 3) // 4, 100 * 1024 * 1024)


def _ln_silu_epilogue(dense, identity, gamma, beta, dim_out):
    """LayerNorm over the first `dim_out` channels + residual add + SiLU.

    Padded channels of `dense`/`identity` are exactly zero by construction (zero-padded
    weight columns / bias), and gamma/beta are zero on the pads, so padded output channels
    stay exactly zero with no explicit mask and the stats need no masking either.
    """
    inv_n = 1.0 / float(dim_out)
    s = jnp.sum(dense, axis=-1, keepdims=True)                 # one pass over dense
    ss = jnp.sum(dense * dense, axis=-1, keepdims=True)
    mean = s * inv_n
    var = jnp.maximum(ss * inv_n - mean * mean, 0.0)           # f32 one-pass variance
    ln = (dense - mean) * jax.lax.rsqrt(var + LN_EPS) * gamma + beta
    out = ln + identity
    # SiLU: x * sigmoid(x) == x * 0.5 * (1 + tanh(x/2)) -> single EUP op per element.
    return out * (0.5 * jnp.tanh(0.5 * out) + 0.5)


def _resblock_skip_kernel(x_ref, w_ref, bd_ref, g_ref, b_ref, o_ref, acc_ref, *,
                          cp, dim_out):
    """dim_in != dim_out.  w = [Wd^T | Ws^T] (bf16) K-tiled; acc_ref is the f32 accumulator."""
    k = pl.program_id(1)

    @pl.when(k == 0)
    def _init():
        acc_ref[...] = jnp.zeros_like(acc_ref)

    xk = x_ref[...].astype(jnp.bfloat16)                       # cast on VPU; x streamed once
    acc_ref[...] += jnp.dot(xk, w_ref[...], preferred_element_type=jnp.float32)

    @pl.when(k == pl.num_programs(1) - 1)
    def _epilogue():
        y = acc_ref[...]
        dense = y[:, :cp] + bd_ref[...]
        identity = y[:, cp:]                                   # skip Linear output (no bias)
        o_ref[...] = _ln_silu_epilogue(dense, identity, g_ref[...], b_ref[...],
                                       dim_out).astype(o_ref.dtype)


def _resblock_noskip_kernel(x_ref, w_ref, bd_ref, g_ref, b_ref, o_ref, *, dim_out):
    """dim_in == dim_out.  Single K pass (square weight resident); identity added in f32."""
    x = x_ref[...]
    dense = jnp.dot(x.astype(jnp.bfloat16), w_ref[...],
                    preferred_element_type=jnp.float32) + bd_ref[...]
    identity = x.astype(jnp.float32)                           # exact residual (not bf16-rounded)
    o_ref[...] = _ln_silu_epilogue(dense, identity, g_ref[...], b_ref[...],
                                   dim_out).astype(o_ref.dtype)


def resblock_forward(x, params, *, tile_m=512, tile_k=512, out_dtype=None):
    """x: [N, dim_in].  params: PyTorch-layout ResBlock weights (see init_params)."""
    N, dim_in = x.shape
    wd = params["dense_w"]                                     # (dim_out, dim_in)
    dim_out = wd.shape[0]
    has_skip = params.get("skip_w") is not None
    out_dtype = jnp.dtype(out_dtype or x.dtype)                # bf16 here halves writeback (v5e)

    assert tile_k % LANE == 0
    f32, bf16 = jnp.float32, jnp.bfloat16
    budget = _vmem_budget_bytes()

    cp = _round_up(dim_out, LANE)                              # lane-dense output width

    if has_skip:
        w_cols = 2 * cp                                        # [dense | skip] fused matmul
        tk = min(tile_k, _round_up(dim_in, LANE))
        # Keep the double-buffered bf16 weight block within ~1/3 of the VMEM budget.
        tk_cap = max(LANE, (budget // (3 * 2 * w_cols * 2)) // LANE * LANE)
        tk = max(LANE, min(tk, tk_cap))
        kp = _round_up(dim_in, tk)                             # pad K so K tiles divide exactly
        k_blocks = kp // tk
    else:
        w_cols = cp
        kp = _round_up(dim_in, LANE)                           # == cp (dim_in == dim_out)
        tk = kp
        k_blocks = 1
        # TODO(synk): K-tile the square no-skip weight too (only needed for dim >~ 3.5k on
        # v7x); needs an aligned dynamic lane slice of x or a second full-width x stream
        # so the identity stays exact f32.

    # Row tile: as large as the budget allows, but >= 2 M programs so both v7x TCs get work.
    tm = min(_round_up(tile_m, SUBLANE), _round_up(N, SUBLANE))
    if N > SUBLANE and _cdiv(N, tm) < 2:
        tm = _round_up(_cdiv(N, 2), SUBLANE)

    x_item = jnp.dtype(x.dtype).itemsize
    out_item = out_dtype.itemsize

    def vmem_need(tm_):
        x_cols = tk if has_skip else kp
        return (2 * tm_ * x_cols * x_item                      # x blocks (double-buffered)
                + 2 * tk * w_cols * 2                          # bf16 weight blocks
                + 2 * tm_ * cp * out_item                      # output blocks
                + (tm_ * w_cols * 4 if has_skip else 0)        # f32 accumulator scratch
                + 2 * 3 * cp * 4                               # bias / gamma / beta
                + 3 * tm_ * w_cols * 4 + (2 << 20))            # epilogue f32 temporaries

    while tm > SUBLANE and vmem_need(tm) > budget:
        tm = max(SUBLANE, _round_up(tm // 2, SUBLANE))

    grid = (_cdiv(N, tm), k_blocks)

    # ---- wrapper-side prep: pad only what is strictly needed (no bf16 copy of x). ----
    def pad2(a, rows, cols):
        r, c = a.shape
        return a if (r, c) == (rows, cols) else jnp.pad(a, ((0, rows - r), (0, cols - c)))

    x_p = pad2(x, N, kp)                                       # no row padding, no dtype change
    wd_t = pad2(wd.T, kp, cp)
    if has_skip:
        w = jnp.concatenate([wd_t, pad2(params["skip_w"].T, kp, cp)], axis=1).astype(bf16)
    else:
        w = wd_t.astype(bf16)
    bd = pad2(params["dense_b"].reshape(1, -1), 1, cp).astype(f32)
    gamma = pad2(params["ln_gamma"].reshape(1, -1), 1, cp).astype(f32)
    beta = pad2(params["ln_beta"].reshape(1, -1), 1, cp).astype(f32)

    const = lambda shape: pl.BlockSpec(shape, lambda i, k: (0,) * len(shape))
    # TODO(synk): once the main pallas_call pipeline honors pipeline_mode=pl.Buffered(1),
    # single-buffer the grid-invariant specs (weight/bias/gamma/beta) to halve their VMEM.

    if has_skip:
        kernel = functools.partial(_resblock_skip_kernel, cp=cp, dim_out=dim_out)
        x_spec = pl.BlockSpec((tm, tk), lambda i, k: (i, k))
        w_spec = pl.BlockSpec((tk, w_cols), lambda i, k: (k, 0))
        scratch = [pltpu.VMEM((tm, w_cols), jnp.float32)]
    else:
        kernel = functools.partial(_resblock_noskip_kernel, dim_out=dim_out)
        x_spec = pl.BlockSpec((tm, kp), lambda i, k: (i, 0))
        w_spec = const((kp, cp))
        scratch = []

    out = pl.pallas_call(
        kernel,
        out_shape=jax.ShapeDtypeStruct((N, cp), out_dtype),
        grid_spec=pltpu.PrefetchScalarGridSpec(
            num_scalar_prefetch=0,
            grid=grid,
            in_specs=[x_spec, w_spec, const((1, cp)), const((1, cp)), const((1, cp))],
            out_specs=pl.BlockSpec((tm, cp), lambda i, k: (i, 0)),
            scratch_shapes=scratch,
        ),
        compiler_params=pltpu.CompilerParams(
            dimension_semantics=("parallel", "arbitrary"),
            vmem_limit_bytes=int(budget),
        ),
    )(x_p, w, bd, gamma, beta)

    return out if cp == dim_out else out[:, :dim_out]


def init_params(key, dim_in, dim_out, bias=True):
    """Deterministic synthetic init mimicking nn.Linear / nn.LayerNorm shapes."""
    k1, k2, k3 = jax.random.split(key, 3)
    bound = 1.0 / jnp.sqrt(dim_in)
    return {
        "dense_w": jax.random.uniform(k1, (dim_out, dim_in), jnp.float32, -bound, bound),
        "dense_b": (jax.random.uniform(k2, (1, dim_out), jnp.float32, -bound, bound)
                    if bias else jnp.zeros((1, dim_out), jnp.float32)),
        "ln_gamma": jnp.ones((1, dim_out), jnp.float32),
        "ln_beta": jnp.zeros((1, dim_out), jnp.float32),
        "skip_w": (jax.random.uniform(k3, (dim_out, dim_in), jnp.float32, -bound, bound)
                   if dim_in != dim_out else None),
    }


def reference_forward(x, params):
    """Plain-JAX f32 reference (semantically identical to the PyTorch module)."""
    out = x @ params["dense_w"].T + params["dense_b"]
    mean = jnp.mean(out, axis=-1, keepdims=True)
    var = jnp.mean((out - mean) ** 2, axis=-1, keepdims=True)
    out = (out - mean) * jax.lax.rsqrt(var + LN_EPS) * params["ln_gamma"] + params["ln_beta"]
    identity = x if params["skip_w"] is None else x @ params["skip_w"].T
    out = out + identity
    return out * jax.nn.sigmoid(out)


if __name__ == "__main__":
    key = jax.random.PRNGKey(0)
    kx, kp1, kp2 = jax.random.split(key, 3)

    # Case 1: dim_in != dim_out  (fused dense+skip matmul, K-tiled accumulator grid)
    N, dim_in, dim_out = 16, 32, 64
    x = jax.random.normal(kx, (N, dim_in), jnp.float32)
    params = init_params(kp1, dim_in, dim_out)
    out = resblock_forward(x, params)
    jax.block_until_ready(out)
    ref = reference_forward(x, params)
    assert out.shape == (N, dim_out)
    assert jnp.allclose(out, ref, rtol=2e-2, atol=2e-2), "mismatch (skip case)"

    # Case 2: dim_in == dim_out  (identity skip, exact f32 residual)
    params2 = init_params(kp2, dim_in, dim_in)
    out2 = resblock_forward(x, params2)
    jax.block_until_ready(out2)
    ref2 = reference_forward(x, params2)
    assert out2.shape == (N, dim_in)
    assert jnp.allclose(out2, ref2, rtol=2e-2, atol=2e-2), "mismatch (no-skip case)"

    print("KERNEL_OK")
</pallas_src>

<mosaic_0001>
module attributes {stable_mosaic.version = 11 : i64} {
  func.func @_resblock_skip_kernel(%arg0: i32, %arg1: i32, %arg2: memref<8x128xf32, #tpu.memory_space<vmem>>, %arg3: memref<128x256xbf16, #tpu.memory_space<vmem>>, %arg4: memref<1x128xf32, #tpu.memory_space<vmem>>, %arg5: memref<1x128xf32, #tpu.memory_space<vmem>>, %arg6: memref<1x128xf32, #tpu.memory_space<vmem>>, %arg7: memref<8x128xf32, #tpu.memory_space<vmem>>, %arg8: memref<8x256xf32, #tpu.memory_space<vmem>>) attributes {dimension_semantics = [#tpu.dimension_semantics<parallel>, #tpu.dimension_semantics<arbitrary>], iteration_bounds = array<i64: 2, 1>, scalar_prefetch = 0 : i64, scratch_operands = 1 : i64, tpu.core_type = #tpu.core_type<tc>, window_params = [{transform_indices = @transform_0, window_bounds = array<i64: 8, 128>}, {transform_indices = @transform_1, window_bounds = array<i64: 128, 256>}, {pipeline_mode = #tpu.pipeline_mode<synchronous>, transform_indices = @transform_2, window_bounds = array<i64: 1, 128>}, {pipeline_mode = #tpu.pipeline_mode<synchronous>, transform_indices = @transform_3, window_bounds = array<i64: 1, 128>}, {pipeline_mode = #tpu.pipeline_mode<synchronous>, transform_indices = @transform_4, window_bounds = array<i64: 1, 128>}, {transform_indices = @transform_5, window_bounds = array<i64: 8, 128>}]} {
    %c0_i32 = arith.constant 0 : i32
    %0 = arith.cmpi eq, %arg1, %c0_i32 : i32
    %1 = arith.extui %0 : i1 to i32
    %c0_i32_0 = arith.constant 0 : i32
    %2 = arith.cmpi ne, %1, %c0_i32_0 : i32
    scf.if %2 {
      %cst_10 = arith.constant 0.000000e+00 : f32
      %13 = vector.broadcast %cst_10 : f32 to vector<8x256xf32>
      %c0_11 = arith.constant 0 : index
      %c0_12 = arith.constant 0 : index
      %14 = vector.load %arg8[%c0_11, %c0_12] : memref<8x256xf32, #tpu.memory_space<vmem>>, vector<8x256xf32>
      tpu.vector_store %arg8[%c0_11, %c0_12], %13 {strides = array<i32>} : memref<8x256xf32, #tpu.memory_space<vmem>>, vector<8x256xf32>,
    } else {
    }
    %c0 = arith.constant 0 : index
    %c0_1 = arith.constant 0 : index
    %3 = vector.load %arg2[%c0, %c0_1] : memref<8x128xf32, #tpu.memory_space<vmem>>, vector<8x128xf32>
    %4 = arith.truncf %3 : vector<8x128xf32> to vector<8x128xbf16>
    %c0_2 = arith.constant 0 : index
    %c0_3 = arith.constant 0 : index
    %5 = vector.load %arg8[%c0_2, %c0_3] : memref<8x256xf32, #tpu.memory_space<vmem>>, vector<8x256xf32>
    %c0_4 = arith.constant 0 : index
    %c0_5 = arith.constant 0 : index
    %6 = vector.load %arg3[%c0_4, %c0_5] : memref<128x256xbf16, #tpu.memory_space<vmem>>, vector<128x256xbf16>
    %cst = arith.constant dense<0.000000e+00> : vector<8x256xf32>
    %7 = tpu.matmul %4, %6, %cst {dimension_numbers = #tpu.dot_dimension_numbers<[1], [0], [0], [1], [0, 0, 1, 1], [], []>} : vector<8x128xbf16>, vector<128x256xbf16>, vector<8x256xf32> -> vector<8x256xf32>
    %8 = arith.addf %5, %7 : vector<8x256xf32>
    %c0_6 = arith.constant 0 : index
    %c0_7 = arith.constant 0 : index
    %9 = vector.load %arg8[%c0_6, %c0_7] : memref<8x256xf32, #tpu.memory_space<vmem>>, vector<8x256xf32>
    tpu.vector_store %arg8[%c0_6, %c0_7], %8 {strides = array<i32>} : memref<8x256xf32, #tpu.memory_space<vmem>>, vector<8x256xf32>,
    %c0_i32_8 = arith.constant 0 : i32
    %10 = arith.cmpi eq, %arg1, %c0_i32_8 : i32
    %11 = arith.extui %10 : i1 to i32
    %c0_i32_9 = arith.constant 0 : i32
    %12 = arith.cmpi ne, %11, %c0_i32_9 : i32
    scf.if %12 {
      %c0_10 = arith.constant 0 : index
      %c0_11 = arith.constant 0 : index
      %13 = vector.load %arg8[%c0_10, %c0_11] : memref<8x256xf32, #tpu.memory_space<vmem>>, vector<8x256xf32>
      %14 = vector.extract_strided_slice %13 {offsets = [0, 0], sizes = [8, 128], strides = [1, 1]} : vector<8x256xf32> to vector<8x128xf32>
      %c0_12 = arith.constant 0 : index
      %c0_13 = arith.constant 0 : index
      %15 = vector.load %arg4[%c0_12, %c0_13] : memref<1x128xf32, #tpu.memory_space<vmem>>, vector<1x128xf32>
      %16 = vector.broadcast %15 : vector<1x128xf32> to vector<8x128xf32>
      %17 = arith.addf %14, %16 : vector<8x128xf32>
      %18 = vector.extract_strided_slice %13 {offsets = [0, 128], sizes = [8, 128], strides = [1, 1]} : vector<8x256xf32> to vector<8x128xf32>
      %c0_14 = arith.constant 0 : index
      %c0_15 = arith.constant 0 : index
      %19 = vector.load %arg5[%c0_14, %c0_15] : memref<1x128xf32, #tpu.memory_space<vmem>>, vector<1x128xf32>
      %c0_16 = arith.constant 0 : index
      %c0_17 = arith.constant 0 : index
      %20 = vector.load %arg6[%c0_16, %c0_17] : memref<1x128xf32, #tpu.memory_space<vmem>>, vector<1x128xf32>
      %cst_18 = arith.constant dense<0.000000e+00> : vector<8xf32>
      %21 = vector.multi_reduction <add>, %17, %cst_18 [1] : vector<8x128xf32> to vector<8xf32>
      %22 = vector.shape_cast %21 : vector<8xf32> to vector<8x1xf32>
      %23 = arith.mulf %17, %17 : vector<8x128xf32>
      %cst_19 = arith.constant dense<0.000000e+00> : vector<8xf32>
      %24 = vector.multi_reduction <add>, %23, %cst_19 [1] : vector<8x128xf32> to vector<8xf32>
      %25 = vector.shape_cast %24 : vector<8xf32> to vector<8x1xf32>
      %cst_20 = arith.constant 1.562500e-02 : f32
      %26 = vector.broadcast %cst_20 : f32 to vector<8x1xf32>
      %27 = arith.mulf %22, %26 : vector<8x1xf32>
      %cst_21 = arith.constant 1.562500e-02 : f32
      %28 = vector.broadcast %cst_21 : f32 to vector<8x1xf32>
      %29 = arith.mulf %25, %28 : vector<8x1xf32>
      %30 = arith.mulf %27, %27 : vector<8x1xf32>
      %31 = arith.subf %29, %30 : vector<8x1xf32>
      %cst_22 = arith.constant 0.000000e+00 : f32
      %32 = vector.broadcast %cst_22 : f32 to vector<8x1xf32>
      %33 = arith.maximumf %31, %32 : vector<8x1xf32>
      %34 = vector.broadcast %27 : vector<8x1xf32> to vector<8x128xf32>
      %35 = arith.subf %17, %34 : vector<8x128xf32>
      %cst_23 = arith.constant 9.99999974E-6 : f32
      %36 = vector.broadcast %cst_23 : f32 to vector<8x1xf32>
      %37 = arith.addf %33, %36 : vector<8x1xf32>
      %38 = math.rsqrt %37 : vector<8x1xf32>
      %39 = vector.broadcast %38 : vector<8x1xf32> to vector<8x128xf32>
      %40 = arith.mulf %35, %39 : vector<8x128xf32>
      %41 = vector.broadcast %19 : vector<1x128xf32> to vector<8x128xf32>
      %42 = arith.mulf %40, %41 : vector<8x128xf32>
      %43 = vector.broadcast %20 : vector<1x128xf32> to vector<8x128xf32>
      %44 = arith.addf %42, %43 : vector<8x128xf32>
      %45 = arith.addf %44, %18 : vector<8x128xf32>
      %cst_24 = arith.constant 5.000000e-01 : f32
      %46 = vector.broadcast %cst_24 : f32 to vector<8x128xf32>
      %47 = arith.mulf %46, %45 : vector<8x128xf32>
      %48 = math.tanh %47 : vector<8x128xf32>
      %cst_25 = arith.constant 5.000000e-01 : f32
      %49 = vector.broadcast %cst_25 : f32 to vector<8x128xf32>
      %50 = arith.mulf %49, %48 : vector<8x128xf32>
      %cst_26 = arith.constant 5.000000e-01 : f32
      %51 = vector.broadcast %cst_26 : f32 to vector<8x128xf32>
      %52 = arith.addf %50, %51 : vector<8x128xf32>
      %53 = arith.mulf %45, %52 : vector<8x128xf32>
      %c0_27 = arith.constant 0 : index
      %c0_28 = arith.constant 0 : index
      %54 = vector.load %arg7[%c0_27, %c0_28] : memref<8x128xf32, #tpu.memory_space<vmem>>, vector<8x128xf32>
      tpu.vector_store %arg7[%c0_27, %c0_28], %53 {strides = array<i32>} : memref<8x128xf32, #tpu.memory_space<vmem>>, vector<8x128xf32>,
    } else {
    }
    return
  }
  func.func @transform_0(%arg0: i32, %arg1: i32) -> (i32, i32) {
    %c0_i32 = arith.constant 0 : i32
    return %arg0, %arg1 : i32, i32
  }
  func.func @transform_1(%arg0: i32, %arg1: i32) -> (i32, i32) {
    %c0_i32 = arith.constant 0 : i32
    %c0_i32_0 = arith.constant 0 : i32
    return %arg1, %c0_i32 : i32, i32
  }
  func.func @transform_2(%arg0: i32, %arg1: i32) -> (i32, i32) {
    %c0_i32 = arith.constant 0 : i32
    %c0_i32_0 = arith.constant 0 : i32
    %c0_i32_1 = arith.constant 0 : i32
    return %c0_i32, %c0_i32_0 : i32, i32
  }
  func.func @transform_3(%arg0: i32, %arg1: i32) -> (i32, i32) {
    %c0_i32 = arith.constant 0 : i32
    %c0_i32_0 = arith.constant 0 : i32
    %c0_i32_1 = arith.constant 0 : i32
    return %c0_i32, %c0_i32_0 : i32, i32
  }
  func.func @transform_4(%arg0: i32, %arg1: i32) -> (i32, i32) {
    %c0_i32 = arith.constant 0 : i32
    %c0_i32_0 = arith.constant 0 : i32
    %c0_i32_1 = arith.constant 0 : i32
    return %c0_i32, %c0_i32_0 : i32, i32
  }
  func.func @transform_5(%arg0: i32, %arg1: i32) -> (i32, i32) {
    %c0_i32 = arith.constant 0 : i32
    %c0_i32_0 = arith.constant 0 : i32
    return %arg0, %c0_i32 : i32, i32
  }
}

</mosaic_0001>

<llo_original>
// kernel: tpu_custom_call.1
$region0: #{tpu_custom_call.1}
  #allocation0 [shape = 'u32[]', space=smem, size = 0x4, offset = 0x4, fixed_abs, tag = 'smem constant byte address 0x4 - core index']
  #allocation1 [shape = 'u32[144,128]{1,0:T(1,128)}', space=vmem, size = 0x12000, scoped, tag = 'internal scratch']
  #allocation2 [shape = 'f32[8,256]{1,0:T(8,128)}', space=vmem, size = 0x2000, scoped, tag = 'scratch operand']
  %s0 = inlined_call_operand.hbm [shape: f32[16,128], index: 0, kind: input, shape index: {}]
  %s1 = inlined_call_operand.hbm [shape: bf16[128,256], index: 1, kind: input, shape index: {}]
  %s2 = inlined_call_operand.vmem [shape: f32[1,128], index: 2, kind: input, shape index: {}]
  %s3 = inlined_call_operand.vmem [shape: f32[1,128], index: 3, kind: input, shape index: {}]
  %s4 = inlined_call_operand.vmem [shape: f32[1,128], index: 4, kind: input, shape index: {}]
  %s5 = inlined_call_operand.hbm [shape: f32[16,128], index: 5, kind: output, shape index: {}]
  %s6 = sld [smem:[#allocation0]]
  $region69: #{tpu_custom_call.1} parent=0
    _
  %s8 = ssub.s32 1, %s6
  %s9 = scalar_select 0, %s8, %s6
  $region1: #{tpu_custom_call.1} parent=0
    #allocation3 [shape = 'u8[8192]{0}', space=vmem, size = 0x2000, scoped, tag = 'input window, operand 0']
    #allocation4 [shape = 's32[2]{0}', space=sflag, size = 0x8, scoped, tag = 'scoped memory for tpu_custom_call.1']
    #allocation5 [shape = 's32[2]{0}', space=sflag, size = 0x8, scoped, tag = 'scoped memory for tpu_custom_call.1']
    #allocation6 [shape = 'u8[65536]{0}', space=vmem, size = 0x10000, scoped, tag = 'input window, operand 1, single buffered']
    #allocation7 [shape = 's32[1]{0}', space=sflag, size = 0x4, scoped, tag = 'scoped memory for tpu_custom_call.1']
    #allocation8 [shape = 'u8[8192]{0}', space=vmem, size = 0x2000, scoped, tag = 'output window, operand 0']
    %10 = vsyncpa [#allocation4], 0
    %s11 = scalar_lea.sflag [#allocation4], 1
    %12 = vsyncpa %s11, 0
    %13 = vsyncpa [#allocation7], 0
    %14 = vsyncpa [#allocation5], 0
    %s15 = scalar_lea.sflag [#allocation5], 1
    %16 = vsyncpa %s15, 0
    loop: start=0, step=1, limit=4
    $region2: #{tpu_custom_call.1} parent=1 // loop_pre_header
      _
    $region3: #{tpu_custom_call.1} parent=1 // loop_header
      %s18 = sphi 0, %s22
      %p19 = scmp.ge.s32.totalorder %s18, 4
      %s25 = sphi 0, %s37
      %s26 = sphi 0, %s33
      %s27 = sphi 0, %s25
      %s28 = sphi 0, %s26
      %s29 = sphi 0, %s27
      %s30 = sphi 0, %s28
      %s42 = sphi 0, %s44
      %s45 = sphi 0, %s42
      %s46 = sphi 0, %s45
      %s62 = sphi 0, %s46
      %s68 = sphi 0, %s70
      %s71 = sphi 0, %s68
      %s72 = sphi 0, %s71
      %s88 = sphi 0, %s72
      %s92 = sphi 0, %s92
      %s94 = sphi 0, %s92
      %s95 = sphi 0, %s94
      %s109 = sphi 0, %s95
      %s113 = sphi 0, %s113
      %s115 = sphi 0, %s113
      %s116 = sphi 0, %s115
      %s130 = sphi 0, %s116
      %s134 = sphi 0, %s134
      %s136 = sphi 0, %s134
      %s137 = sphi 0, %s136
      %s151 = sphi 0, %s137
      %s157 = sphi 0, %s159
      %s160 = sphi 0, %s157
      %s161 = sphi 0, %s160
      %s177 = sphi 0, %s161
    $region4: #{tpu_custom_call.1} parent=1 // loop_header_branch
      %21 = sbr.rel (%p19) target = $region8
    $region5: #{tpu_custom_call.1} parent=1 // loop_body
      %s23 = ssub.s32 %s18, 1
      %s24 = ssub.s32 %s18, 2
      %s31 = sadd.s32 1, %s26
      %p32 = scmp.ge.s32.totalorder %s31, 1
      %s33 = scalar_select %p32, 0, %s31
      %s34 = sadd.s32 1, %s25
      %s35 = scalar_select %p32, %s34, %s25
      %p36 = scmp.ge.s32.totalorder %s35, 2
      %s37 = scalar_select %p36, 0, %s35
      %s38 = ssub.s32 %s25, %s37
      %s39 = ssub.s32 %s26, %s33
      %s40 = sor.u32 %s38, %s39
      %p41 = scmp.eq.s32.totalorder %s40, 0
      %s43 = sadd.s32 %s42, 1
      %s44 = scalar_select %p41, %s42, %s43
      %p47 = pneg %p41
      %p48 = scmp.eq.s32.totalorder %s18, 1
      %p49 = por %p47, %p48
      %p50 = scmp.ne.s32.totalorder %s42, %s45
      %p51 = scmp.eq.s32.totalorder %s18, 0
      %p52 = por %p50, %p51
      %p53 = scmp.ne.s32.totalorder %s42, %s45
      %p54 = scmp.eq.s32.totalorder %s23, 1
      %p55 = por %p53, %p54
      %p56 = scmp.ne.s32.totalorder %s45, %s46
      %p57 = scmp.eq.s32.totalorder %s23, 0
      %p58 = por %p56, %p57
      %p59 = scmp.ne.s32.totalorder %s45, %s46
      %p60 = scmp.eq.s32.totalorder %s24, 1
      %p61 = por %p59, %p60
      %p63 = scmp.ne.s32.totalorder %s46, %s62
      %p64 = scmp.eq.s32.totalorder %s24, 0
      %p65 = por %p63, %p64
      %s66 = ssub.s32 %s26, %s33
      %p67 = scmp.eq.s32.totalorder %s66, 0
      %s69 = sadd.s32 %s68, 1
      %s70 = scalar_select %p67, %s68, %s69
      %p73 = pneg %p67
      %p74 = scmp.eq.s32.totalorder %s18, 1
      %p75 = por %p73, %p74
      %p76 = scmp.ne.s32.totalorder %s68, %s71
      %p77 = scmp.eq.s32.totalorder %s18, 0
      %p78 = por %p76, %p77
      %p79 = scmp.ne.s32.totalorder %s68, %s71
      %p80 = scmp.eq.s32.totalorder %s23, 1
      %p81 = por %p79, %p80
      %p82 = scmp.ne.s32.totalorder %s71, %s72
      %p83 = scmp.eq.s32.totalorder %s23, 0
      %p84 = por %p82, %p83
      %p85 = scmp.ne.s32.totalorder %s71, %s72
      %p86 = scmp.eq.s32.totalorder %s24, 1
      %p87 = por %p85, %p86
      %p89 = scmp.ne.s32.totalorder %s72, %s88
      %p90 = scmp.eq.s32.totalorder %s24, 0
      %p91 = por %p89, %p90
      %s93 = sadd.s32 %s92, 1
      %p96 = scmp.eq.s32.totalorder %s18, 1
      %p97 = scmp.ne.s32.totalorder %s92, %s94
      %p98 = scmp.eq.s32.totalorder %s18, 0
      %p99 = por %p97, %p98
      %p100 = scmp.ne.s32.totalorder %s92, %s94
      %p101 = scmp.eq.s32.totalorder %s23, 1
      %p102 = por %p100, %p101
      %p103 = scmp.ne.s32.totalorder %s94, %s95
      %p104 = scmp.eq.s32.totalorder %s23, 0
      %p105 = por %p103, %p104
      %p106 = scmp.ne.s32.totalorder %s94, %s95
      %p107 = scmp.eq.s32.totalorder %s24, 1
      %p108 = por %p106, %p107
      %p110 = scmp.ne.s32.totalorder %s95, %s109
      %p111 = scmp.eq.s32.totalorder %s24, 0
      %p112 = por %p110, %p111
      %s114 = sadd.s32 %s113, 1
      %p117 = scmp.eq.s32.totalorder %s18, 1
      %p118 = scmp.ne.s32.totalorder %s113, %s115
      %p119 = scmp.eq.s32.totalorder %s18, 0
      %p120 = por %p118, %p119
      %p121 = scmp.ne.s32.totalorder %s113, %s115
      %p122 = scmp.eq.s32.totalorder %s23, 1
      %p123 = por %p121, %p122
      %p124 = scmp.ne.s32.totalorder %s115, %s116
      %p125 = scmp.eq.s32.totalorder %s23, 0
      %p126 = por %p124, %p125
      %p127 = scmp.ne.s32.totalorder %s115, %s116
      %p128 = scmp.eq.s32.totalorder %s24, 1
      %p129 = por %p127, %p128
      %p131 = scmp.ne.s32.totalorder %s116, %s130
      %p132 = scmp.eq.s32.totalorder %s24, 0
      %p133 = por %p131, %p132
      %s135 = sadd.s32 %s134, 1
      %p138 = scmp.eq.s32.totalorder %s18, 1
      %p139 = scmp.ne.s32.totalorder %s134, %s136
      %p140 = scmp.eq.s32.totalorder %s18, 0
      %p141 = por %p139, %p140
      %p142 = scmp.ne.s32.totalorder %s134, %s136
      %p143 = scmp.eq.s32.totalorder %s23, 1
      %p144 = por %p142, %p143
      %p145 = scmp.ne.s32.totalorder %s136, %s137
      %p146 = scmp.eq.s32.totalorder %s23, 0
      %p147 = por %p145, %p146
      %p148 = scmp.ne.s32.totalorder %s136, %s137
      %p149 = scmp.eq.s32.totalorder %s24, 1
      %p150 = por %p148, %p149
      %p152 = scmp.ne.s32.totalorder %s137, %s151
      %p153 = scmp.eq.s32.totalorder %s24, 0
      %p154 = por %p152, %p153
      %s155 = ssub.s32 %s25, %s37
      %p156 = scmp.eq.s32.totalorder %s155, 0
      %s158 = sadd.s32 %s157, 1
      %s159 = scalar_select %p156, %s157, %s158
      %p162 = pneg %p156
      %p163 = scmp.eq.s32.totalorder %s18, 1
      %p164 = por %p162, %p163
      %p165 = scmp.ne.s32.totalorder %s157, %s160
      %p166 = scmp.eq.s32.totalorder %s18, 0
      %p167 = por %p165, %p166
      %p168 = scmp.ne.s32.totalorder %s157, %s160
      %p169 = scmp.eq.s32.totalorder %s23, 1
      %p170 = por %p168, %p169
      %p171 = scmp.ne.s32.totalorder %s160, %s161
      %p172 = scmp.eq.s32.totalorder %s23, 0
      %p173 = por %p171, %p172
      %p174 = scmp.ne.s32.totalorder %s160, %s161
      %p175 = scmp.eq.s32.totalorder %s24, 1
      %p176 = por %p174, %p175
      %p178 = scmp.ne.s32.totalorder %s161, %s177
      %p179 = scmp.eq.s32.totalorder %s24, 0
      %p180 = por %p178, %p179
      %p181 = scmp.le.s32.totalorder 1, %s18
      %p182 = scmp.lt.s32.totalorder %s18, 3
      %p183 = pnand %p181, %p182
      %p184 = pneg %p183
      // Predicated region
      $region9: #{tpu_custom_call.1} parent=5 // pred_check
        _
      $region10: #{tpu_custom_call.1} parent=5 // pred_check_branch
        %186 = sbr.rel (%p183) target = $region12
      $region11: #{tpu_custom_call.1} parent=5 // pred_region
        %s187 = ssub.s32 %s18, 1
        // Predicated region
        $region13: #{tpu_custom_call.1} parent=11 // pred_check
          %p188 = pneg %p84
        $region14: #{tpu_custom_call.1} parent=11 // pred_check_branch
          %190 = sbr.rel (%p188) target = $region16
        $region15: #{tpu_custom_call.1} parent=11 // pred_region
          %s191 = smul.u32 16, %s28
          %s193 = ssub.s32 2048, 2048
          %194 = vsyncadd [#allocation7], %s193
          %s195 = smul.addr %s191, 2
          %s196 = smul.addr %s195, 64
          %s197 = scalar_lea.hbm %s1, %s196
          %s198 = sshll.u32 [#allocation6], 4
          %s199 = int_to_ptr.vmem [resolvable:$true] %s198
          %204 = dma.hbm_to_vmem [thread:$0]  %s197, 2048, %s199, [#allocation7], 128, 128, 8
        $region16: #{tpu_custom_call.1} parent=11 // pred_fallthru
          _
        // Predicated region
        $region17: #{tpu_custom_call.1} parent=11 // pred_check
          %p205 = pneg %p105
        $region18: #{tpu_custom_call.1} parent=11 // pred_check_branch
          %207 = sbr.rel (%p205) target = $region20
        $region19: #{tpu_custom_call.1} parent=11 // pred_region
          _
        $region20: #{tpu_custom_call.1} parent=11 // pred_fallthru
          _
        // Predicated region
        $region21: #{tpu_custom_call.1} parent=11 // pred_check
          %p208 = pneg %p126
        $region22: #{tpu_custom_call.1} parent=11 // pred_check_branch
          %210 = sbr.rel (%p208) target = $region24
        $region23: #{tpu_custom_call.1} parent=11 // pred_region
          _
        $region24: #{tpu_custom_call.1} parent=11 // pred_fallthru
          _
        // Predicated region
        $region25: #{tpu_custom_call.1} parent=11 // pred_check
          %p211 = pneg %p147
        $region26: #{tpu_custom_call.1} parent=11 // pred_check_branch
          %213 = sbr.rel (%p211) target = $region28
        $region27: #{tpu_custom_call.1} parent=11 // pred_region
          _
        $region28: #{tpu_custom_call.1} parent=11 // pred_fallthru
          _
      $region12: #{tpu_custom_call.1} parent=5 // pred_fallthru
        _
      %p214 = scmp.lt.s32.totalorder %s18, 2
      // Predicated region
      $region29: #{tpu_custom_call.1} parent=5 // pred_check
        %p215 = pneg %p214
      $region30: #{tpu_custom_call.1} parent=5 // pred_check_branch
        %217 = sbr.rel (%p215) target = $region32
      $region31: #{tpu_custom_call.1} parent=5 // pred_region
        // Predicated region
        $region33: #{tpu_custom_call.1} parent=31 // pred_check
          %p218 = pneg %p52
        $region34: #{tpu_custom_call.1} parent=31 // pred_check_branch
          %220 = sbr.rel (%p218) target = $region36
        $region35: #{tpu_custom_call.1} parent=31 // pred_region
          %s221 = sand.u32 %s42, 1
          %s222 = scalar_lea.sflag [#allocation4], %s221
          %s223 = sand.u32 %s42, 1
          %s224 = smul.addr %s223, 8
          %s225 = scalar_lea.vmem [#allocation3], %s224
          %s227 = ssub.s32 128, 128
          %228 = vsyncadd %s222, %s227
          %s229 = sadd.s32 %s26, %s25
          %s230 = smul.addr %s229, 128
          %s231 = scalar_lea.hbm %s0, %s230
          %s233 = sshll.u32 %s225, 4
          %s234 = int_to_ptr.vmem [resolvable:$true] %s233
          %236 = dma.hbm_to_vmem [thread:$0]  %s231, 128, %s234, %s222
        $region36: #{tpu_custom_call.1} parent=31 // pred_fallthru
          _
      $region32: #{tpu_custom_call.1} parent=5 // pred_fallthru
        _
      %p237 = scmp.le.s32.totalorder 1, %s18
      %p238 = scmp.lt.s32.totalorder %s18, 3
      %p239 = pnand %p237, %p238
      %p240 = pneg %p239
      // Predicated region
      $region37: #{tpu_custom_call.1} parent=5 // pred_check
        _
      $region38: #{tpu_custom_call.1} parent=5 // pred_check_branch
        %242 = sbr.rel (%p239) target = $region40
      $region39: #{tpu_custom_call.1} parent=5 // pred_region
        %s243 = ssub.s32 %s18, 1
        %s244 = sand.u32 %s45, 1
        %s245 = scalar_lea.sflag [#allocation4], %s244
        %s246 = sand.u32 %s45, 1
        %s247 = smul.addr %s246, 8
        %s248 = scalar_lea.vmem [#allocation3], %s247
        // Predicated region
        $region41: #{tpu_custom_call.1} parent=39 // pred_check
          %p249 = pneg %p58
        $region42: #{tpu_custom_call.1} parent=39 // pred_check_branch
          %251 = sbr.rel (%p249) target = $region44
        $region43: #{tpu_custom_call.1} parent=39 // pred_region
          %252 = dma.done %s245, 128
        $region44: #{tpu_custom_call.1} parent=39 // pred_fallthru
          _
        // Predicated region
        $region45: #{tpu_custom_call.1} parent=39 // pred_check
          %p253 = pneg %p84
        $region46: #{tpu_custom_call.1} parent=39 // pred_check_branch
          %255 = sbr.rel (%p253) target = $region48
        $region47: #{tpu_custom_call.1} parent=39 // pred_region
          %256 = dma.done [#allocation7], 2048
        $region48: #{tpu_custom_call.1} parent=39 // pred_fallthru
          _
        %s257 = sand.u32 %s45, 1
        %s258 = scalar_lea.sflag [#allocation4], %s257
        %s259 = sand.u32 %s45, 1
        %s260 = smul.addr %s259, 8
        %s261 = scalar_lea.vmem [#allocation3], %s260
        %p262 = pneg %p58
        %p263 = pneg %p55
        %p264 = pneg %p84
        %p265 = pneg %p81
        %p266 = pneg %p105
        %p267 = pneg %p102
        %p268 = pneg %p126
        %p269 = pneg %p123
        %p270 = pneg %p147
        %p271 = pneg %p144
        %p272 = pneg %p173
        %p273 = pneg %p170
        %s274 = sand.u32 %s160, 1
        %s275 = scalar_lea.sflag [#allocation5], %s274
        %s276 = sand.u32 %s160, 1
        %s277 = smul.addr %s276, 8
        %s278 = scalar_lea.vmem [#allocation8], %s277
        %s279 = smul.u32 16, %s28
        %p281 = scmp.eq.s32.totalorder %s28, 0
        // Predicated region
        $region49: #{tpu_custom_call.1} parent=39 // pred_check
          %p282 = pneg %p281
        $region50: #{tpu_custom_call.1} parent=39 // pred_check_branch
          %284 = sbr.rel (%p282) target = $region52
        $region51: #{tpu_custom_call.1} parent=39 // pred_region
          %285 = vst [vmem:[#allocation2] sm:$0xff] 0.0
          %286 = vst [vmem:[#allocation2 + $0x8] sm:$0xff] 0.0
        $region52: #{tpu_custom_call.1} parent=39 // pred_fallthru
          _
        %v287 = vld [vmem:[%s248] sm:$0xff]
        %v288 = vpack.c.bf16 %v287, %v287
        %v289 = vld [vmem:[#allocation2] sm:$0xff]
        %v290 = vld [vmem:[#allocation2 + $0x8] sm:$0xff]
        %v291 = vld [vmem:[#allocation6] sm:$0xff]
        %v292 = vld [vmem:[#allocation6 + $0x8] sm:$0xff]
        %v293 = vld [vmem:[#allocation6 + $0x10] sm:$0xff]
        %v294 = vld [vmem:[#allocation6 + $0x18] sm:$0xff]
        %v295 = vld [vmem:[#allocation6 + $0x20] sm:$0xff]
        %v296 = vld [vmem:[#allocation6 + $0x28] sm:$0xff]
        %v297 = vld [vmem:[#allocation6 + $0x30] sm:$0xff]
        %v298 = vld [vmem:[#allocation6 + $0x38] sm:$0xff]
        %v299 = vld [vmem:[#allocation6 + $0x40] sm:$0xff]
        %v300 = vld [vmem:[#allocation6 + $0x48] sm:$0xff]
        %v301 = vld [vmem:[#allocation6 + $0x50] sm:$0xff]
        %v302 = vld [vmem:[#allocation6 + $0x58] sm:$0xff]
        %v303 = vld [vmem:[#allocation6 + $0x60] sm:$0xff]
        %v304 = vld [vmem:[#allocation6 + $0x68] sm:$0xff]
        %v305 = vld [vmem:[#allocation6 + $0x70] sm:$0xff]
        %v306 = vld [vmem:[#allocation6 + $0x78] sm:$0xff]
        %v323 = vunpack.c.l.b16 %v291
        %v324 = vunpack.c.h.b16 %v291
        %v325 = vunpack.c.l.b16 %v292
        %v326 = vunpack.c.h.b16 %v292
        %v327 = vunpack.c.l.b16 %v293
        %v328 = vunpack.c.h.b16 %v293
        %v329 = vunpack.c.l.b16 %v294
        %v330 = vunpack.c.h.b16 %v294
        %v331 = vunpack.c.l.b16 %v295
        %v332 = vunpack.c.h.b16 %v295
        %v333 = vunpack.c.l.b16 %v296
        %v334 = vunpack.c.h.b16 %v296
        %v335 = vunpack.c.l.b16 %v297
        %v336 = vunpack.c.h.b16 %v297
        %v337 = vunpack.c.l.b16 %v298
        %v338 = vunpack.c.h.b16 %v298
        %v339 = vunpack.c.l.b16 %v299
        %v340 = vunpack.c.h.b16 %v299
        %v341 = vunpack.c.l.b16 %v300
        %v342 = vunpack.c.h.b16 %v300
        %v343 = vunpack.c.l.b16 %v301
        %v344 = vunpack.c.h.b16 %v301
        %v345 = vunpack.c.l.b16 %v302
        %v346 = vunpack.c.h.b16 %v302
        %v347 = vunpack.c.l.b16 %v303
        %v348 = vunpack.c.h.b16 %v303
        %v349 = vunpack.c.l.b16 %v304
        %v350 = vunpack.c.h.b16 %v304
        %v351 = vunpack.c.l.b16 %v305
        %v352 = vunpack.c.h.b16 %v305
        %v353 = vunpack.c.l.b16 %v306
        %v354 = vunpack.c.h.b16 %v306
        %v355 = vpack.c.b16 %v325, %v323
        %v356 = vpack.c.b16 %v326, %v324
        %v357 = vpack.c.b16 %v329, %v327
        %v358 = vpack.c.b16 %v330, %v328
        %v359 = vpack.c.b16 %v333, %v331
        %v360 = vpack.c.b16 %v334, %v332
        %v361 = vpack.c.b16 %v337, %v335
        %v362 = vpack.c.b16 %v338, %v336
        %v363 = vpack.c.b16 %v341, %v339
        %v364 = vpack.c.b16 %v342, %v340
        %v365 = vpack.c.b16 %v345, %v343
        %v366 = vpack.c.b16 %v346, %v344
        %v367 = vpack.c.b16 %v349, %v347
        %v368 = vpack.c.b16 %v350, %v348
        %v369 = vpack.c.b16 %v353, %v351
        %v370 = vpack.c.b16 %v354, %v352
        %387 = vmatprep.subr.bf16.mxu0 %v370
        %388 = vmatpush1.bf16.msra.mxu0 %v369
        %389 = vmatprep.subr.bf16.mxu0 %v368
        %390 = vmatpush1.bf16.msra.mxu0 %v367
        %391 = vmatprep.subr.bf16.mxu0 %v366
        %392 = vmatpush1.bf16.msra.mxu0 %v365
        %393 = vmatprep.subr.bf16.mxu0 %v364
        %394 = vmatpush1.bf16.msra.mxu0 %v363
        %395 = vmatprep.subr.bf16.mxu0 %v362
        %396 = vmatpush1.bf16.msra.mxu0 %v361
        %397 = vmatprep.subr.bf16.mxu0 %v360
        %398 = vmatpush1.bf16.msra.mxu0 %v359
        %399 = vmatprep.subr.bf16.mxu0 %v358
        %400 = vmatpush1.bf16.msra.mxu0 %v357
        %401 = vmatprep.subr.bf16.mxu0 %v356
        %402 = vmatpush1.bf16.msra.mxu0 %v355
        %403 = vmatprep.subr.bf16.mxu0 0
        %404 = vmatpush2.bf16.msra.mxu0 0
        %405 = vmatprep.subr.bf16.mxu0 0
        %406 = vmatpush2.bf16.msra.mxu0 0
        %407 = vmatprep.subr.bf16.mxu0 0
        %408 = vmatpush2.bf16.msra.mxu0 0
        %409 = vmatprep.subr.bf16.mxu0 0
        %410 = vmatpush2.bf16.msra.mxu0 0
        %411 = vmatprep.subr.bf16.mxu0 0
        %412 = vmatpush2.bf16.msra.mxu0 0
        %413 = vmatprep.subr.bf16.mxu0 0
        %414 = vmatpush2.bf16.msra.mxu0 0
        %415 = vmatprep.subr.bf16.mxu0 0
        %416 = vmatpush2.bf16.msra.mxu0 0
        %417 = vmatprep.subr.bf16.mxu0 0
        %418 = vmatpush2.bf16.msra.mxu0 0
        %419 = vmatprep.mubr.bf16.mxu0 0
        %420 = vmatmul.mubr.bf16.gmra.mxu0 %v288
        %v421 = vpop.f32.mrf.mxu0
        %v422 = vadd.f32 0.0, %v421
        %v423 = vpop.f32.mrf.mxu0
        %v424 = vadd.f32 0.0, %v423
        %v425 = vpop.f32.mrf.mxu0
        %v426 = vpop.f32.mrf.mxu0
        %427 = vdwg.mxu0
        %v428 = vadd.f32 %v289, %v422
        %v429 = vadd.f32 %v290, %v424
        %430 = vst [vmem:[#allocation2] sm:$0xff] %v428
        %431 = vst [vmem:[#allocation2 + $0x8] sm:$0xff] %v429
        // Predicated region
        $region53: #{tpu_custom_call.1} parent=39 // pred_check
          %p432 = pneg %p281
        $region54: #{tpu_custom_call.1} parent=39 // pred_check_branch
          %434 = sbr.rel (%p432) target = $region56
        $region55: #{tpu_custom_call.1} parent=39 // pred_region
          %v435 = vld [vmem:[#allocation2] sm:$0xff]
          %v436 = vld [vmem:[#allocation2 + $0x8] sm:$0xff]
          %v437 = vld [vmem:[%s2] sm:$0x1]
          %v439 = vlaneseq
          %v440 = vshrl.u32 %v439, 7
          %v441 = vsub.s32 0, %v440
          %v442 = vrot.slane %v437, %v441
          %v444 = vadd.f32 %v435, %v442
          %v445 = vld [vmem:[%s3] sm:$0x1]
          %v446 = vld [vmem:[%s4] sm:$0x1]
          %447 = vadd.xlane.f32.xlu0 %v444
          %v448 = vpop.xlane.xlu0 %447
          %v449 = vmul.f32 %v444, %v444
          %450 = vadd.xlane.f32.xlu0 %v449
          %v451 = vpop.xlane.xlu0 %450
          %v452 = vmul.f32 %v448, 0.015625
          %v453 = vmul.f32 %v451, 0.015625
          %v454 = vmul.f32 %v452, %v452
          %v455 = vsub.f32 %v453, %v454
          %v456 = vmax.f32 %v455, 0.0
          %v457 = vsub.f32 %v444, %v452
          %v458 = vadd.f32 %v456, 1e-05
          %v459 = vrsqrt.pop %v458
          %v460 = vmul.f32 %v457, %v459
          %v462 = vlaneseq
          %v463 = vshrl.u32 %v462, 7
          %v464 = vsub.s32 0, %v463
          %v465 = vrot.slane %v445, %v464
          %v467 = vmul.f32 %v460, %v465
          %v469 = vlaneseq
          %v470 = vshrl.u32 %v469, 7
          %v471 = vsub.s32 0, %v470
          %v472 = vrot.slane %v446, %v471
          %v474 = vadd.f32 %v467, %v472
          %v475 = vadd.f32 %v474, %v436
          %v476 = vmul.f32 %v475, 0.5
          %v477 = vtanh.pop %v476
          %v478 = vmul.f32 %v477, 0.5
          %v479 = vadd.f32 %v478, 0.5
          %v480 = vmul.f32 %v475, %v479
          %481 = vst [vmem:[%s278] sm:$0xff] %v480
        $region56: #{tpu_custom_call.1} parent=39 // pred_fallthru
          _
        %s482 = sand.u32 %s160, 1
        %s483 = scalar_lea.sflag [#allocation5], %s482
        %s484 = sand.u32 %s160, 1
        %s485 = smul.addr %s484, 8
        %s486 = scalar_lea.vmem [#allocation8], %s485
        // Predicated region
        $region57: #{tpu_custom_call.1} parent=39 // pred_check
          %p487 = pneg %p170
        $region58: #{tpu_custom_call.1} parent=39 // pred_check_branch
          %489 = sbr.rel (%p487) target = $region60
        $region59: #{tpu_custom_call.1} parent=39 // pred_region
          %s491 = ssub.s32 128, 128
          %492 = vsyncadd %s483, %s491
          %s493 = smul.addr %s27, 128
          %s494 = scalar_lea.hbm %s5, %s493
          %s496 = sshll.u32 %s486, 4
          %s497 = int_to_ptr.vmem [resolvable:$true] %s496
          %499 = dma.vmem_to_hbm [thread:$0]  %s497, 128, %s494, %s483
        $region60: #{tpu_custom_call.1} parent=39 // pred_fallthru
          _
      $region40: #{tpu_custom_call.1} parent=5 // pred_fallthru
        _
      %p500 = scmp.le.s32.totalorder 2, %s18
      // Predicated region
      $region61: #{tpu_custom_call.1} parent=5 // pred_check
        %p501 = pneg %p500
      $region62: #{tpu_custom_call.1} parent=5 // pred_check_branch
        %503 = sbr.rel (%p501) target = $region64
      $region63: #{tpu_custom_call.1} parent=5 // pred_region
        %s504 = ssub.s32 %s18, 2
        // Predicated region
        $region65: #{tpu_custom_call.1} parent=63 // pred_check
          %p505 = pneg %p176
        $region66: #{tpu_custom_call.1} parent=63 // pred_check_branch
          %507 = sbr.rel (%p505) target = $region68
        $region67: #{tpu_custom_call.1} parent=63 // pred_region
          %s508 = sand.u32 %s161, 1
          %s509 = scalar_lea.sflag [#allocation5], %s508
          %s510 = sand.u32 %s161, 1
          %s511 = smul.addr %s510, 8
          %s512 = scalar_lea.vmem [#allocation8], %s511
          %513 = dma.done %s509, 128
        $region68: #{tpu_custom_call.1} parent=63 // pred_fallthru
          _
      $region64: #{tpu_custom_call.1} parent=5 // pred_fallthru
        _
    $region6: #{tpu_custom_call.1} parent=1 // loop_footer
      %s22 = sadd.s32 1, %s18
    $region7: #{tpu_custom_call.1} parent=1 // loop_footer_branch
      %17 = sbr.rel target = $region3
    $region8: #{tpu_custom_call.1} parent=1 // loop_exit
      _
    %514 = vsyncpa [#allocation4], 1
    %s515 = scalar_lea.sflag [#allocation4], 1
    %516 = vsyncpa %s515, 1
    %517 = vsyncpa [#allocation7], 1
    %518 = vsyncpa [#allocation5], 1
    %s519 = scalar_lea.sflag [#allocation5], 1
    %520 = vsyncpa %s519, 1

</llo_original>
